<compile_context>
chip_gen: v6e
topology: v6e:2x2x1
jax: 0.10.0
libtpu: 0.0.40
codegen_flags: <defaults>
</compile_context>

<pallas_src>
import jax
import jax.numpy as jnp
from jax.experimental import pallas as pl
from jax.experimental.pallas import tpu as pltpu


def _discriminator_kernel(inp_ref, lat_ref, w1_ref, b1_ref, w2_ref, b2_ref,
                          w3_ref, b3_ref, o_ref):
    inp = inp_ref[...]                       # (tb, 1)
    lat = lat_ref[...]                       # (tb, 1)

    # fc1: Linear(2, 256) as two broadcast FMAs on the VPU (K=2 matmul is
    # pure MXU latency), then LeakyReLU(0.2).
    w1_in = w1_ref[0:1, :]                   # (1, 256) row for the `input` feature
    w1_lat = w1_ref[1:2, :]                  # (1, 256) row for the `latent` feature
    h1 = inp * w1_in + lat * w1_lat + b1_ref[...]          # (tb, 256)
    h1 = jnp.maximum(h1, 0.2 * h1)

    # fc2: Linear(256, 256) on the MXU + LeakyReLU(0.2).
    h2 = jnp.dot(h1, w2_ref[...],
                 preferred_element_type=jnp.float32) + b2_ref[...]   # (tb, 256)
    h2 = jnp.maximum(h2, 0.2 * h2)

    # fc3: Linear(256, 1) as a lane reduce (XLU) with lane-dense (1,256) w3,
    # scalar bias from SMEM, then Sigmoid.
    h3 = jnp.sum(h2 * w3_ref[...], axis=-1, keepdims=True) + b3_ref[0, 0]  # (tb, 1)
    o_ref[...] = jax.nn.sigmoid(h3)


def discriminator_forward(inp, latent, params, *, block_b=256):
    """inp: (B, 1), latent: (B, 1)  ->  (B, 1) probabilities."""
    inp = inp.astype(jnp.float32)
    latent = latent.astype(jnp.float32)
    B = inp.shape[0]
    w1, b1, w2, b2, w3, b3 = params

    # Batch tile: large and sublane-aligned when possible, otherwise the full
    # (small) batch as a single tile.
    if B % block_b == 0:
        tb = block_b
    else:
        tb = B
    grid = (pl.cdiv(B, tb),)

    vmem = pltpu.MemorySpace.VMEM
    smem = pltpu.MemorySpace.SMEM

    row_spec = pl.BlockSpec((tb, 1), lambda i: (i, 0), memory_space=vmem)
    # Weights/biases: full-array blocks, resident across all batch tiles.
    w1_spec = pl.BlockSpec((2, 256), lambda i: (0, 0), memory_space=vmem)
    b1_spec = pl.BlockSpec((1, 256), lambda i: (0, 0), memory_space=vmem)
    w2_spec = pl.BlockSpec((256, 256), lambda i: (0, 0), memory_space=vmem)
    b2_spec = pl.BlockSpec((1, 256), lambda i: (0, 0), memory_space=vmem)
    w3_spec = pl.BlockSpec((1, 256), lambda i: (0, 0), memory_space=vmem)
    b3_spec = pl.BlockSpec(memory_space=smem)      # (1,1) scalar, whole array

    out = pl.pallas_call(
        _discriminator_kernel,
        out_shape=jax.ShapeDtypeStruct((B, 1), jnp.float32),
        grid=grid,
        in_specs=[row_spec, row_spec,
                  w1_spec, b1_spec, w2_spec, b2_spec, w3_spec, b3_spec],
        out_specs=pl.BlockSpec((tb, 1), lambda i: (i, 0), memory_space=vmem),
        compiler_params=pltpu.CompilerParams(
            dimension_semantics=("parallel",)),
    )(inp, latent, w1, b1, w2, b2, w3, b3)
    return out


def init_params(key):
    """Deterministic init mimicking utils.initialize_weights (N(0,0.02), bias 0).

    w1, w2 stored as (in_features, out_features); w3 stored lane-dense as
    (1, 256) = (out_features, in_features), matching the torch layout.
    """
    k1, k2, k3 = jax.random.split(key, 3)
    std = 0.02
    w1 = jax.random.normal(k1, (2, 256), jnp.float32) * std
    b1 = jnp.zeros((1, 256), jnp.float32)
    w2 = jax.random.normal(k2, (256, 256), jnp.float32) * std
    b2 = jnp.zeros((1, 256), jnp.float32)
    w3 = jax.random.normal(k3, (1, 256), jnp.float32) * std
    b3 = jnp.zeros((1, 1), jnp.float32)
    return (w1, b1, w2, b2, w3, b3)


def _reference_forward(inp, latent, params):
    w1, b1, w2, b2, w3, b3 = params
    x = jnp.concatenate([inp, latent], axis=1)           # (B, 2)
    h = x @ w1 + b1
    h = jnp.where(h >= 0, h, 0.2 * h)
    h = h @ w2 + b2
    h = jnp.where(h >= 0, h, 0.2 * h)
    h = h @ w3.T + b3
    return jax.nn.sigmoid(h)


if __name__ == "__main__":
    key = jax.random.PRNGKey(0)
    k_in, k_lat, k_par = jax.random.split(key, 3)

    B = 8  # small, sublane-friendly demo batch
    inp = jax.random.normal(k_in, (B, 1), jnp.float32)
    latent = jax.random.normal(k_lat, (B, 1), jnp.float32)
    params = init_params(k_par)

    out = discriminator_forward(inp, latent, params)
    out = jax.block_until_ready(out)

    ref = _reference_forward(inp, latent, params)
    assert out.shape == (B, 1)
    assert jnp.allclose(out, ref, atol=1e-5, rtol=1e-5)

    print("KERNEL_OK")
</pallas_src>

<mosaic_0001>
module attributes {stable_mosaic.version = 11 : i64} {
  func.func @_discriminator_kernel(%arg0: i32, %arg1: memref<8x1xf32, #tpu.memory_space<vmem>>, %arg2: memref<8x1xf32, #tpu.memory_space<vmem>>, %arg3: memref<2x256xf32, #tpu.memory_space<vmem>>, %arg4: memref<1x256xf32, #tpu.memory_space<vmem>>, %arg5: memref<256x256xf32, #tpu.memory_space<vmem>>, %arg6: memref<1x256xf32, #tpu.memory_space<vmem>>, %arg7: memref<1x256xf32, #tpu.memory_space<vmem>>, %arg8: memref<1x1xf32, #tpu.memory_space<smem>>, %arg9: memref<8x1xf32, #tpu.memory_space<vmem>>) attributes {dimension_semantics = [#tpu.dimension_semantics<parallel>], iteration_bounds = array<i64: 1>, scalar_prefetch = 0 : i64, scratch_operands = 0 : i64, tpu.core_type = #tpu.core_type<tc>, window_params = [{transform_indices = @transform_0, window_bounds = array<i64: 8, 1>}, {transform_indices = @transform_1, window_bounds = array<i64: 8, 1>}, {pipeline_mode = #tpu.pipeline_mode<synchronous>, transform_indices = @transform_2, window_bounds = array<i64: 2, 256>}, {pipeline_mode = #tpu.pipeline_mode<synchronous>, transform_indices = @transform_3, window_bounds = array<i64: 1, 256>}, {pipeline_mode = #tpu.pipeline_mode<synchronous>, transform_indices = @transform_4, window_bounds = array<i64: 256, 256>}, {pipeline_mode = #tpu.pipeline_mode<synchronous>, transform_indices = @transform_5, window_bounds = array<i64: 1, 256>}, {pipeline_mode = #tpu.pipeline_mode<synchronous>, transform_indices = @transform_6, window_bounds = array<i64: 1, 256>}, {transform_indices = @transform_7, window_bounds = array<i64: 1, 1>}, {transform_indices = @transform_8, window_bounds = array<i64: 8, 1>}]} {
    %c0 = arith.constant 0 : index
    %c0_0 = arith.constant 0 : index
    %0 = vector.load %arg1[%c0, %c0_0] : memref<8x1xf32, #tpu.memory_space<vmem>>, vector<8x1xf32>
    %c0_1 = arith.constant 0 : index
    %c0_2 = arith.constant 0 : index
    %1 = vector.load %arg2[%c0_1, %c0_2] : memref<8x1xf32, #tpu.memory_space<vmem>>, vector<8x1xf32>
    %c0_3 = arith.constant 0 : index
    %c0_4 = arith.constant 0 : index
    %2 = vector.load %arg3[%c0_3, %c0_4] : memref<2x256xf32, #tpu.memory_space<vmem>>, vector<1x256xf32>
    %c1 = arith.constant 1 : index
    %c0_5 = arith.constant 0 : index
    %3 = vector.load %arg3[%c1, %c0_5] : memref<2x256xf32, #tpu.memory_space<vmem>>, vector<1x256xf32>
    %4 = vector.broadcast %0 : vector<8x1xf32> to vector<8x256xf32>
    %5 = vector.broadcast %2 : vector<1x256xf32> to vector<8x256xf32>
    %6 = arith.mulf %4, %5 : vector<8x256xf32>
    %7 = vector.broadcast %1 : vector<8x1xf32> to vector<8x256xf32>
    %8 = vector.broadcast %3 : vector<1x256xf32> to vector<8x256xf32>
    %9 = arith.mulf %7, %8 : vector<8x256xf32>
    %10 = arith.addf %6, %9 : vector<8x256xf32>
    %c0_6 = arith.constant 0 : index
    %c0_7 = arith.constant 0 : index
    %11 = vector.load %arg4[%c0_6, %c0_7] : memref<1x256xf32, #tpu.memory_space<vmem>>, vector<1x256xf32>
    %12 = vector.broadcast %11 : vector<1x256xf32> to vector<8x256xf32>
    %13 = arith.addf %10, %12 : vector<8x256xf32>
    %cst = arith.constant 2.000000e-01 : f32
    %14 = vector.broadcast %cst : f32 to vector<8x256xf32>
    %15 = arith.mulf %14, %13 : vector<8x256xf32>
    %16 = arith.maximumf %13, %15 : vector<8x256xf32>
    %c0_8 = arith.constant 0 : index
    %c0_9 = arith.constant 0 : index
    %17 = vector.load %arg5[%c0_8, %c0_9] : memref<256x256xf32, #tpu.memory_space<vmem>>, vector<256x256xf32>
    %cst_10 = arith.constant dense<0.000000e+00> : vector<8x256xf32>
    %18 = tpu.matmul %16, %17, %cst_10 {dimension_numbers = #tpu.dot_dimension_numbers<[1], [0], [0], [1], [0, 0, 1, 1], [], []>} : vector<8x256xf32>, vector<256x256xf32>, vector<8x256xf32> -> vector<8x256xf32>
    %c0_11 = arith.constant 0 : index
    %c0_12 = arith.constant 0 : index
    %19 = vector.load %arg6[%c0_11, %c0_12] : memref<1x256xf32, #tpu.memory_space<vmem>>, vector<1x256xf32>
    %20 = vector.broadcast %19 : vector<1x256xf32> to vector<8x256xf32>
    %21 = arith.addf %18, %20 : vector<8x256xf32>
    %cst_13 = arith.constant 2.000000e-01 : f32
    %22 = vector.broadcast %cst_13 : f32 to vector<8x256xf32>
    %23 = arith.mulf %22, %21 : vector<8x256xf32>
    %24 = arith.maximumf %21, %23 : vector<8x256xf32>
    %c0_14 = arith.constant 0 : index
    %c0_15 = arith.constant 0 : index
    %25 = vector.load %arg7[%c0_14, %c0_15] : memref<1x256xf32, #tpu.memory_space<vmem>>, vector<1x256xf32>
    %26 = vector.broadcast %25 : vector<1x256xf32> to vector<8x256xf32>
    %27 = arith.mulf %24, %26 : vector<8x256xf32>
    %cst_16 = arith.constant dense<0.000000e+00> : vector<8xf32>
    %28 = vector.multi_reduction <add>, %27, %cst_16 [1] : vector<8x256xf32> to vector<8xf32>
    %29 = vector.shape_cast %28 : vector<8xf32> to vector<8x1xf32>
    %c0_17 = arith.constant 0 : index
    %c0_18 = arith.constant 0 : index
    %30 = memref.load %arg8[%c0_17, %c0_18] : memref<1x1xf32, #tpu.memory_space<smem>>
    %31 = vector.broadcast %30 : f32 to vector<8x1xf32>
    %32 = arith.addf %29, %31 : vector<8x1xf32>
    %33 = arith.negf %32 : vector<8x1xf32>
    %34 = math.exp %33 : vector<8x1xf32>
    %cst_19 = arith.constant 1.000000e+00 : f32
    %35 = vector.broadcast %cst_19 : f32 to vector<8x1xf32>
    %36 = arith.addf %35, %34 : vector<8x1xf32>
    %37 = arith.divf %35, %36 : vector<8x1xf32>
    %c0_20 = arith.constant 0 : index
    %c0_21 = arith.constant 0 : index
    %38 = vector.load %arg9[%c0_20, %c0_21] : memref<8x1xf32, #tpu.memory_space<vmem>>, vector<8x1xf32>
    tpu.vector_store %arg9[%c0_20, %c0_21], %37 {strides = array<i32>} : memref<8x1xf32, #tpu.memory_space<vmem>>, vector<8x1xf32>,
    return
  }
  func.func @transform_0(%arg0: i32) -> (i32, i32) {
    %c0_i32 = arith.constant 0 : i32
    %c0_i32_0 = arith.constant 0 : i32
    return %arg0, %c0_i32 : i32, i32
  }
  func.func @transform_1(%arg0: i32) -> (i32, i32) {
    %c0_i32 = arith.constant 0 : i32
    %c0_i32_0 = arith.constant 0 : i32
    return %arg0, %c0_i32 : i32, i32
  }
  func.func @transform_2(%arg0: i32) -> (i32, i32) {
    %c0_i32 = arith.constant 0 : i32
    %c0_i32_0 = arith.constant 0 : i32
    %c0_i32_1 = arith.constant 0 : i32
    return %c0_i32, %c0_i32_0 : i32, i32
  }
  func.func @transform_3(%arg0: i32) -> (i32, i32) {
    %c0_i32 = arith.constant 0 : i32
    %c0_i32_0 = arith.constant 0 : i32
    %c0_i32_1 = arith.constant 0 : i32
    return %c0_i32, %c0_i32_0 : i32, i32
  }
  func.func @transform_4(%arg0: i32) -> (i32, i32) {
    %c0_i32 = arith.constant 0 : i32
    %c0_i32_0 = arith.constant 0 : i32
    %c0_i32_1 = arith.constant 0 : i32
    return %c0_i32, %c0_i32_0 : i32, i32
  }
  func.func @transform_5(%arg0: i32) -> (i32, i32) {
    %c0_i32 = arith.constant 0 : i32
    %c0_i32_0 = arith.constant 0 : i32
    %c0_i32_1 = arith.constant 0 : i32
    return %c0_i32, %c0_i32_0 : i32, i32
  }
  func.func @transform_6(%arg0: i32) -> (i32, i32) {
    %c0_i32 = arith.constant 0 : i32
    %c0_i32_0 = arith.constant 0 : i32
    %c0_i32_1 = arith.constant 0 : i32
    return %c0_i32, %c0_i32_0 : i32, i32
  }
  func.func @transform_7(%arg0: i32) -> (i32, i32) {
    %c0_i32 = arith.constant 0 : i32
    %c0_i32_0 = arith.constant 0 : i32
    %c0_i32_1 = arith.constant 0 : i32
    return %c0_i32, %c0_i32_0 : i32, i32
  }
  func.func @transform_8(%arg0: i32) -> (i32, i32) {
    %c0_i32 = arith.constant 0 : i32
    %c0_i32_0 = arith.constant 0 : i32
    return %arg0, %c0_i32 : i32, i32
  }
}

</mosaic_0001>

<llo_original>
// kernel: tpu_custom_call.1
$region0: #{tpu_custom_call.1}
  #allocation0 [shape = 'u32[]', space=smem, size = 0x4, offset = 0x4, fixed_abs, tag = 'smem constant byte address 0x4 - core index']
  #allocation1 [shape = 'u32[144,128]{1,0:T(1,128)}', space=vmem, size = 0x12000, scoped, tag = 'internal scratch']
  #allocation2 [shape = 'f32[1,1]{1,0:T(1,128)S(6)}', space=smem, size = 0x200, scoped, tag = 'scoped memory for tpu_custom_call.1']
  %s0 = inlined_call_operand.vmem [shape: f32[8,1], index: 0, kind: input, shape index: {}]
  %s1 = inlined_call_operand.vmem [shape: f32[8,1], index: 1, kind: input, shape index: {}]
  %s2 = inlined_call_operand.vmem [shape: f32[2,256], index: 2, kind: input, shape index: {}]
  %s3 = inlined_call_operand.vmem [shape: f32[1,256], index: 3, kind: input, shape index: {}]
  %s4 = inlined_call_operand.hbm [shape: f32[256,256], index: 4, kind: input, shape index: {}]
  %s5 = inlined_call_operand.vmem [shape: f32[1,256], index: 5, kind: input, shape index: {}]
  %s6 = inlined_call_operand.vmem [shape: f32[1,256], index: 6, kind: input, shape index: {}]
  %s7 = inlined_call_operand.<no memory space> [shape: f32[1,1], index: 7, kind: input, shape index: {}]
  %s8 = inlined_call_operand.vmem [shape: f32[8,1], index: 8, kind: output, shape index: {}]
  %s9 = sld [smem:[#allocation0]]
  $region46: #{tpu_custom_call.1} parent=0
    _
  %s11 = ssub.s32 1, %s9
  %s12 = scalar_select 0, %s11, %s9
  %13 = sst [smem:[#allocation2]] %s7
  $region1: #{tpu_custom_call.1} parent=0
    #allocation3 [shape = 'u8[262144]{0}', space=vmem, size = 0x40000, scoped, tag = 'input window, operand 4, single buffered']
    #allocation4 [shape = 's32[1]{0}', space=sflag, size = 0x4, scoped, tag = 'scoped memory for tpu_custom_call.1']
    %14 = vsyncpa [#allocation4], 0
    // Predicated region
    $region2: #{tpu_custom_call.1} parent=1 // pred_check
      _
    $region3: #{tpu_custom_call.1} parent=1 // pred_check_branch
      %16 = sbr.rel (0) target = $region5
    $region4: #{tpu_custom_call.1} parent=1 // pred_region
      _
    $region5: #{tpu_custom_call.1} parent=1 // pred_fallthru
      _
    // Predicated region
    $region6: #{tpu_custom_call.1} parent=1 // pred_check
      _
    $region7: #{tpu_custom_call.1} parent=1 // pred_check_branch
      %18 = sbr.rel (0) target = $region9
    $region8: #{tpu_custom_call.1} parent=1 // pred_region
      _
    $region9: #{tpu_custom_call.1} parent=1 // pred_fallthru
      _
    // Predicated region
    $region10: #{tpu_custom_call.1} parent=1 // pred_check
      _
    $region11: #{tpu_custom_call.1} parent=1 // pred_check_branch
      %20 = sbr.rel (0) target = $region13
    $region12: #{tpu_custom_call.1} parent=1 // pred_region
      _
    $region13: #{tpu_custom_call.1} parent=1 // pred_fallthru
      _
    // Predicated region
    $region14: #{tpu_custom_call.1} parent=1 // pred_check
      _
    $region15: #{tpu_custom_call.1} parent=1 // pred_check_branch
      %22 = sbr.rel (0) target = $region17
    $region16: #{tpu_custom_call.1} parent=1 // pred_region
      _
    $region17: #{tpu_custom_call.1} parent=1 // pred_fallthru
      _
    // Predicated region
    $region18: #{tpu_custom_call.1} parent=1 // pred_check
      _
    $region19: #{tpu_custom_call.1} parent=1 // pred_check_branch
      %24 = sbr.rel (0) target = $region21
    $region20: #{tpu_custom_call.1} parent=1 // pred_region
      %s26 = ssub.s32 8192, 8192
      %27 = vsyncadd [#allocation4], %s26
      %s28 = sshll.u32 [#allocation3], 4
      %s29 = int_to_ptr.vmem [resolvable:$true] %s28
      %34 = dma.hbm_to_vmem [thread:$0]  %s4, 8192, %s29, [#allocation4], 256, 256, 16
    $region21: #{tpu_custom_call.1} parent=1 // pred_fallthru
      _
    // Predicated region
    $region22: #{tpu_custom_call.1} parent=1 // pred_check
      _
    $region23: #{tpu_custom_call.1} parent=1 // pred_check_branch
      %36 = sbr.rel (0) target = $region25
    $region24: #{tpu_custom_call.1} parent=1 // pred_region
      _
    $region25: #{tpu_custom_call.1} parent=1 // pred_fallthru
      _
    // Predicated region
    $region26: #{tpu_custom_call.1} parent=1 // pred_check
      _
    $region27: #{tpu_custom_call.1} parent=1 // pred_check_branch
      %38 = sbr.rel (0) target = $region29
    $region28: #{tpu_custom_call.1} parent=1 // pred_region
      _
    $region29: #{tpu_custom_call.1} parent=1 // pred_fallthru
      _
    // Predicated region
    $region30: #{tpu_custom_call.1} parent=1 // pred_check
      _
    $region31: #{tpu_custom_call.1} parent=1 // pred_check_branch
      %40 = sbr.rel (0) target = $region33
    $region32: #{tpu_custom_call.1} parent=1 // pred_region
      _
    $region33: #{tpu_custom_call.1} parent=1 // pred_fallthru
      _
    // Predicated region
    $region34: #{tpu_custom_call.1} parent=1 // pred_check
      _
    $region35: #{tpu_custom_call.1} parent=1 // pred_check_branch
      %42 = sbr.rel (0) target = $region37
    $region36: #{tpu_custom_call.1} parent=1 // pred_region
      %43 = dma.done [#allocation4], 8192
    $region37: #{tpu_custom_call.1} parent=1 // pred_fallthru
      _
    %v44 = vld [vmem:[%s0] sm:$0xff]
    %v45 = vld [vmem:[%s1] sm:$0xff]
    %v46 = vld [vmem:[%s2] ss:$2 sm:$0x3]
    %s47 = scalar_lea.vmem %s2, 1
    %v48 = vld [vmem:[%s47] ss:$2 sm:$0x3]
    %50 = vset.pattern.permute.xlu0 0
    %51 = vperm.xlu0 %50, %v44
    %v52 = vpop.permute.xlu0 %51
    %v55 = vlaneseq
    %v56 = vshrl.u32 %v55, 7
    %v57 = vsub.s32 0, %v56
    %v58 = vrot.slane %v46, %v57
    %v59 = vlaneseq
    %v60 = vshrl.u32 %v59, 7
    %v61 = vsub.s32 1, %v60
    %v62 = vrot.slane %v46, %v61
    %v65 = vmul.f32 %v52, %v58
    %v66 = vmul.f32 %v52, %v62
    %68 = vset.pattern.permute.xlu0 0
    %69 = vperm.xlu0 %68, %v45
    %v70 = vpop.permute.xlu0 %69
    %v73 = vlaneseq
    %v74 = vshrl.u32 %v73, 7
    %v75 = vsub.s32 0, %v74
    %v76 = vrot.slane %v48, %v75
    %v77 = vlaneseq
    %v78 = vshrl.u32 %v77, 7
    %v79 = vsub.s32 1, %v78
    %v80 = vrot.slane %v48, %v79
    %v83 = vmul.f32 %v70, %v76
    %v84 = vmul.f32 %v70, %v80
    %v85 = vadd.f32 %v65, %v83
    %v86 = vadd.f32 %v66, %v84
    %v87 = vld [vmem:[%s3] sm:$0x3]
    %v89 = vlaneseq
    %v90 = vshrl.u32 %v89, 7
    %v91 = vsub.s32 0, %v90
    %v92 = vrot.slane %v87, %v91
    %v93 = vlaneseq
    %v94 = vshrl.u32 %v93, 7
    %v95 = vsub.s32 1, %v94
    %v96 = vrot.slane %v87, %v95
    %v99 = vadd.f32 %v85, %v92
    %v100 = vadd.f32 %v86, %v96
    %v101 = vmul.f32 %v99, 0.2
    %v102 = vmul.f32 %v100, 0.2
    %v103 = vmax.f32 %v99, %v101
    %v104 = vmax.f32 %v100, %v102
    %v105 = vld [vmem:[#allocation3] sm:$0xff]
    %v106 = vld [vmem:[#allocation3 + $0x8] sm:$0xff]
    %v107 = vld [vmem:[#allocation3 + $0x10] sm:$0xff]
    %v108 = vld [vmem:[#allocation3 + $0x18] sm:$0xff]
    %v109 = vld [vmem:[#allocation3 + $0x20] sm:$0xff]
    %v110 = vld [vmem:[#allocation3 + $0x28] sm:$0xff]
    %v111 = vld [vmem:[#allocation3 + $0x30] sm:$0xff]
    %v112 = vld [vmem:[#allocation3 + $0x38] sm:$0xff]
    %v113 = vld [vmem:[#allocation3 + $0x40] sm:$0xff]
    %v114 = vld [vmem:[#allocation3 + $0x48] sm:$0xff]
    %v115 = vld [vmem:[#allocation3 + $0x50] sm:$0xff]
    %v116 = vld [vmem:[#allocation3 + $0x58] sm:$0xff]
    %v117 = vld [vmem:[#allocation3 + $0x60] sm:$0xff]
    %v118 = vld [vmem:[#allocation3 + $0x68] sm:$0xff]
    %v119 = vld [vmem:[#allocation3 + $0x70] sm:$0xff]
    %v120 = vld [vmem:[#allocation3 + $0x78] sm:$0xff]
    %v121 = vld [vmem:[#allocation3 + $0x80] sm:$0xff]
    %v122 = vld [vmem:[#allocation3 + $0x88] sm:$0xff]
    %v123 = vld [vmem:[#allocation3 + $0x90] sm:$0xff]
    %v124 = vld [vmem:[#allocation3 + $0x98] sm:$0xff]
    %v125 = vld [vmem:[#allocation3 + $0xa0] sm:$0xff]
    %v126 = vld [vmem:[#allocation3 + $0xa8] sm:$0xff]
    %v127 = vld [vmem:[#allocation3 + $0xb0] sm:$0xff]
    %v128 = vld [vmem:[#allocation3 + $0xb8] sm:$0xff]
    %v129 = vld [vmem:[#allocation3 + $0xc0] sm:$0xff]
    %v130 = vld [vmem:[#allocation3 + $0xc8] sm:$0xff]
    %v131 = vld [vmem:[#allocation3 + $0xd0] sm:$0xff]
    %v132 = vld [vmem:[#allocation3 + $0xd8] sm:$0xff]
    %v133 = vld [vmem:[#allocation3 + $0xe0] sm:$0xff]
    %v134 = vld [vmem:[#allocation3 + $0xe8] sm:$0xff]
    %v135 = vld [vmem:[#allocation3 + $0xf0] sm:$0xff]
    %v136 = vld [vmem:[#allocation3 + $0xf8] sm:$0xff]
    %v137 = vld [vmem:[#allocation3 + $0x100] sm:$0xff]
    %v138 = vld [vmem:[#allocation3 + $0x108] sm:$0xff]
    %v139 = vld [vmem:[#allocation3 + $0x110] sm:$0xff]
    %v140 = vld [vmem:[#allocation3 + $0x118] sm:$0xff]
    %v141 = vld [vmem:[#allocation3 + $0x120] sm:$0xff]
    %v142 = vld [vmem:[#allocation3 + $0x128] sm:$0xff]
    %v143 = vld [vmem:[#allocation3 + $0x130] sm:$0xff]
    %v144 = vld [vmem:[#allocation3 + $0x138] sm:$0xff]
    %v145 = vld [vmem:[#allocation3 + $0x140] sm:$0xff]
    %v146 = vld [vmem:[#allocation3 + $0x148] sm:$0xff]
    %v147 = vld [vmem:[#allocation3 + $0x150] sm:$0xff]
    %v148 = vld [vmem:[#allocation3 + $0x158] sm:$0xff]
    %v149 = vld [vmem:[#allocation3 + $0x160] sm:$0xff]
    %v150 = vld [vmem:[#allocation3 + $0x168] sm:$0xff]
    %v151 = vld [vmem:[#allocation3 + $0x170] sm:$0xff]
    %v152 = vld [vmem:[#allocation3 + $0x178] sm:$0xff]
    %v153 = vld [vmem:[#allocation3 + $0x180] sm:$0xff]
    %v154 = vld [vmem:[#allocation3 + $0x188] sm:$0xff]
    %v155 = vld [vmem:[#allocation3 + $0x190] sm:$0xff]
    %v156 = vld [vmem:[#allocation3 + $0x198] sm:$0xff]
    %v157 = vld [vmem:[#allocation3 + $0x1a0] sm:$0xff]
    %v158 = vld [vmem:[#allocation3 + $0x1a8] sm:$0xff]
    %v159 = vld [vmem:[#allocation3 + $0x1b0] sm:$0xff]
    %v160 = vld [vmem:[#allocation3 + $0x1b8] sm:$0xff]
    %v161 = vld [vmem:[#allocation3 + $0x1c0] sm:$0xff]
    %v162 = vld [vmem:[#allocation3 + $0x1c8] sm:$0xff]
    %v163 = vld [vmem:[#allocation3 + $0x1d0] sm:$0xff]
    %v164 = vld [vmem:[#allocation3 + $0x1d8] sm:$0xff]
    %v165 = vld [vmem:[#allocation3 + $0x1e0] sm:$0xff]
    %v166 = vld [vmem:[#allocation3 + $0x1e8] sm:$0xff]
    %v167 = vld [vmem:[#allocation3 + $0x1f0] sm:$0xff]
    %v168 = vld [vmem:[#allocation3 + $0x1f8] sm:$0xff]
    %v169 = vld [vmem:[%s5] sm:$0x3]
    %v171 = vlaneseq
    %v172 = vshrl.u32 %v171, 7
    %v173 = vsub.s32 0, %v172
    %v174 = vrot.slane %v169, %v173
    %v175 = vlaneseq
    %v176 = vshrl.u32 %v175, 7
    %v177 = vsub.s32 1, %v176
    %v178 = vrot.slane %v169, %v177
    %181 = vmatprep.subr.mxu0 %v136
    %182 = vmatpush1.msra.mxu0 %v135
    %183 = vmatprep.subr.mxu0 %v134
    %184 = vmatpush1.msra.mxu0 %v133
    %185 = vmatprep.subr.mxu0 %v132
    %186 = vmatpush1.msra.mxu0 %v131
    %187 = vmatprep.subr.mxu0 %v130
    %188 = vmatpush1.msra.mxu0 %v129
    %189 = vmatprep.subr.mxu0 %v128
    %190 = vmatpush1.msra.mxu0 %v127
    %191 = vmatprep.subr.mxu0 %v126
    %192 = vmatpush1.msra.mxu0 %v125
    %193 = vmatprep.subr.mxu0 %v124
    %194 = vmatpush1.msra.mxu0 %v123
    %195 = vmatprep.subr.mxu0 %v122
    %196 = vmatpush1.msra.mxu0 %v121
    %197 = vmatprep.subr.mxu0 %v120
    %198 = vmatpush1.msra.mxu0 %v119
    %199 = vmatprep.subr.mxu0 %v118
    %200 = vmatpush1.msra.mxu0 %v117
    %201 = vmatprep.subr.mxu0 %v116
    %202 = vmatpush1.msra.mxu0 %v115
    %203 = vmatprep.subr.mxu0 %v114
    %204 = vmatpush1.msra.mxu0 %v113
    %205 = vmatprep.subr.mxu0 %v112
    %206 = vmatpush1.msra.mxu0 %v111
    %207 = vmatprep.subr.mxu0 %v110
    %208 = vmatpush1.msra.mxu0 %v109
    %209 = vmatprep.subr.mxu0 %v108
    %210 = vmatpush1.msra.mxu0 %v107
    %211 = vmatprep.subr.mxu0 %v106
    %212 = vmatpush1.msra.mxu0 %v105
    %213 = vmatprep.subr.mxu0 %v168
    %214 = vmatpush2.msra.mxu0 %v167
    %215 = vmatprep.subr.mxu0 %v166
    %216 = vmatpush2.msra.mxu0 %v165
    %217 = vmatprep.subr.mxu0 %v164
    %218 = vmatpush2.msra.mxu0 %v163
    %219 = vmatprep.subr.mxu0 %v162
    %220 = vmatpush2.msra.mxu0 %v161
    %221 = vmatprep.subr.mxu0 %v160
    %222 = vmatpush2.msra.mxu0 %v159
    %223 = vmatprep.subr.mxu0 %v158
    %224 = vmatpush2.msra.mxu0 %v157
    %225 = vmatprep.subr.mxu0 %v156
    %226 = vmatpush2.msra.mxu0 %v155
    %227 = vmatprep.subr.mxu0 %v154
    %228 = vmatpush2.msra.mxu0 %v153
    %229 = vmatprep.subr.mxu0 %v152
    %230 = vmatpush2.msra.mxu0 %v151
    %231 = vmatprep.subr.mxu0 %v150
    %232 = vmatpush2.msra.mxu0 %v149
    %233 = vmatprep.subr.mxu0 %v148
    %234 = vmatpush2.msra.mxu0 %v147
    %235 = vmatprep.subr.mxu0 %v146
    %236 = vmatpush2.msra.mxu0 %v145
    %237 = vmatprep.subr.mxu0 %v144
    %238 = vmatpush2.msra.mxu0 %v143
    %239 = vmatprep.subr.mxu0 %v142
    %240 = vmatpush2.msra.mxu0 %v141
    %241 = vmatprep.subr.mxu0 %v140
    %242 = vmatpush2.msra.mxu0 %v139
    %243 = vmatprep.subr.mxu0 %v138
    %244 = vmatpush2.msra.mxu0 %v137
    %245 = vmatprep.mubr.f32.mxu0 %v104
    %246 = vmatmul.mubr.f32.gmra.mxu0 %v103
    %v247 = vpop.f32.mrf.mxu0
    %v248 = vadd.f32 %v174, %v247
    %v249 = vpop.f32.mrf.mxu0
    %v250 = vadd.f32 %v178, %v249
    %251 = vdwg.mxu0
    %v252 = vmul.f32 %v248, 0.2
    %v253 = vmul.f32 %v250, 0.2
    %v254 = vmax.f32 %v248, %v252
    %v255 = vmax.f32 %v250, %v253
    %v256 = vld [vmem:[%s6] sm:$0x3]
    %v258 = vlaneseq
    %v259 = vshrl.u32 %v258, 7
    %v260 = vsub.s32 0, %v259
    %v261 = vrot.slane %v256, %v260
    %v262 = vlaneseq
    %v263 = vshrl.u32 %v262, 7
    %v264 = vsub.s32 1, %v263
    %v265 = vrot.slane %v256, %v264
    %v268 = vmul.f32 %v254, %v261
    %v269 = vmul.f32 %v255, %v265
    %v270 = vadd.f32 %v268, %v269
    %271 = vadd.xlane.f32.xlu0 %v270
    %v272 = vpop.xlane.xlu0 %271
    %s273 = sld [smem:[#allocation2]]
    %v274 = vstv %s273
    %v275 = vadd.f32 %v272, %v274
    %v276 = vxor.u32 %v275, 2147483648
    %v277 = vmul.f32 %v276, 1.442695
    %v278 = vpow.pop %v277
    %v279 = vadd.f32 %v278, 1.0
    %v280 = vrcp.pop %v279
    %v281 = vmul.f32 1.0, %v280
    %vm282 = vcmask 7168
    %283 = vst.msk [vmem:[%s8] sm:$0xff] %vm282, %v281
    // Predicated region
    $region38: #{tpu_custom_call.1} parent=1 // pred_check
      _
    $region39: #{tpu_custom_call.1} parent=1 // pred_check_branch
      %285 = sbr.rel (0) target = $region41
    $region40: #{tpu_custom_call.1} parent=1 // pred_region
      _
    $region41: #{tpu_custom_call.1} parent=1 // pred_fallthru
      _
    // Predicated region
    $region42: #{tpu_custom_call.1} parent=1 // pred_check
      _
    $region43: #{tpu_custom_call.1} parent=1 // pred_check_branch
      %287 = sbr.rel (0) target = $region45
    $region44: #{tpu_custom_call.1} parent=1 // pred_region
      _
    $region45: #{tpu_custom_call.1} parent=1 // pred_fallthru
      _
    %288 = vsyncpa [#allocation4], 1

</llo_original>
